<compile_context>
chip_gen: v5e
topology: v5e:2x2
jax: 0.10.0
libtpu: 0.0.40
codegen_flags: <defaults>
</compile_context>

<pallas_src>
import functools

import numpy as np
import jax
import jax.numpy as jnp
from jax.experimental import pallas as pl
from jax.experimental.pallas import tpu as pltpu


# ----------------------------------------------------------------------------
# In-kernel helper: 3x3 / stride-1 patch slab (channels-in-sublanes layout)
# ----------------------------------------------------------------------------
def _slab(x_t, wpad, m):
    """x_t: (8, Lp) bf16 flattened zero-padded map, flat index p = y*wpad + x.

    Returns the (72, m) bf16 patch slab for a 3x3, stride-1 conv over the
    padded-width output grid.  Row index = (di*3 + dj)*8 + c, matching the
    weight matrices built by `_weight_mat`.  All 9 taps are contiguous lane
    slices; the sublane concat stacks 8-row-aligned pieces (no relayout)."""
    taps = []
    for di in range(3):
        for dj in range(3):
            off = di * wpad + dj
            taps.append(x_t[:, off:off + m])
    return jnp.concatenate(taps, axis=0)


# ----------------------------------------------------------------------------
# The fused SSD forward kernel (one grid step per batch element)
# ----------------------------------------------------------------------------
def _ssd_fused_kernel(dims, x_ref, w0_ref, b0_ref, s0_ref, wf_ref, b1_ref,
                      epi0_ref, s1_ref, wp1_ref, epi1_ref, p0_ref, p1_ref):
    wpad0, m0, wpad1, m1, wpad2, m2, nch = dims

    # ---- base network: 3x3 s2 p1 conv + ReLU (stride-1 compute, MXU decimate)
    slab0 = _slab(x_ref[0], wpad0, m0)                            # (72, M0)
    f0 = jnp.dot(w0_ref[...], slab0, preferred_element_type=jnp.float32)
    f0 = jnp.maximum(f0 + b0_ref[...], 0.0).astype(jnp.bfloat16)  # (C, M0)
    # decimate (stride 2) + re-pad into next stage's flattened layout (exact)
    xf1 = jnp.dot(f0, s0_ref[...],
                  preferred_element_type=jnp.float32).astype(jnp.bfloat16)

    # ---- fused {extra feature layer (s2 + ReLU) | pred head 0 (s1)}: shared slab
    slab1 = _slab(xf1, wpad1, m1)                                 # (72, M1)
    of = jnp.dot(wf_ref[...], slab1, preferred_element_type=jnp.float32)
    f1 = jnp.maximum(of[:nch, :] + b1_ref[...], 0.0).astype(jnp.bfloat16)
    p0_ref[0] = of[nch:, :] + epi0_ref[...]       # conv bias + anchors fused

    xf2 = jnp.dot(f1, s1_ref[...],
                  preferred_element_type=jnp.float32).astype(jnp.bfloat16)

    # ---- pred head 1 (s1)
    slab2 = _slab(xf2, wpad2, m2)                                 # (72, M2)
    p1 = jnp.dot(wp1_ref[...], slab2, preferred_element_type=jnp.float32)
    p1_ref[0] = p1 + epi1_ref[...]                # conv bias + anchors fused


# ----------------------------------------------------------------------------
# Wrapper-side operand construction (all tiny, trace-time / XLA)
# ----------------------------------------------------------------------------
_CIN_PAD = 8   # input channels zero-padded to 8 so slab pieces are sublane-aligned


def _flat_padded_input(x_nchw):
    b, ci, h, w = x_nchw.shape
    xp = jnp.pad(x_nchw, ((0, 0), (0, _CIN_PAD - ci), (1, 2), (1, 1)))
    return xp.reshape(b, _CIN_PAD, (h + 3) * (w + 2)).astype(jnp.bfloat16)


def _weight_mat(w_oihw):
    """(Cout, Cin, 3, 3) -> (Cout, 72) bf16, column index = (di*3+dj)*8 + c."""
    co, ci, kh, kw = w_oihw.shape
    w = jnp.pad(w_oihw, ((0, 0), (0, _CIN_PAD - ci), (0, 0), (0, 0)))
    return jnp.transpose(w, (0, 2, 3, 1)).reshape(co, kh * kw * _CIN_PAD
                                                  ).astype(jnp.bfloat16)


def _decimation_matrix(h_in, wpad_in, h_out, w_out, wpad_out):
    """(h_in*wpad_in, (h_out+3)*wpad_out) 0/1 bf16 matrix: selects the stride-2
    positions of a stride-1 conv output (over the padded-width grid) and drops
    them into the next stage's zero-padded flattened layout."""
    s = np.zeros((h_in * wpad_in, (h_out + 3) * wpad_out), np.float32)
    for i in range(h_out):
        for j in range(w_out):
            s[2 * i * wpad_in + 2 * j, (i + 1) * wpad_out + (j + 1)] = 1.0
    return jnp.asarray(s, jnp.bfloat16)


def _pred_epilogue(bias, anchor_rows, h, w, wpad):
    """(n_pred_ch, h*wpad) f32 epilogue = conv bias + default anchors, anchors
    placed on the reg channels at valid spatial lanes (pad lanes get trimmed)."""
    npc = bias.shape[0]
    b = bias.astype(jnp.float32)[:, None]
    a = anchor_rows.astype(jnp.float32).reshape(h, w, 16)
    a = jnp.pad(a, ((0, 0), (0, wpad - w), (0, 0)))
    a = jnp.transpose(a, (2, 0, 1)).reshape(16, h * wpad)
    cls_part = jnp.broadcast_to(b[:npc - 16], (npc - 16, h * wpad))
    return jnp.concatenate([cls_part, b[npc - 16:] + a], axis=0)


# ----------------------------------------------------------------------------
# SSD init-time logic (mirrors _set_featuremap_sizes / _set_default_anchor_boxes)
# ----------------------------------------------------------------------------
def set_featuremap_sizes(input_size, conv_strides):
    h, w = input_size
    featuremap_sizes, reduction_ratio = [], []
    for s in conv_strides:            # 3x3 conv, padding 1, stride s
        h = (h + 2 - 3) // s + 1
        w = (w + 2 - 3) // s + 1
        featuremap_sizes.append([h, w])
        reduction_ratio.append([input_size[0] / h, input_size[1] / w])
    return featuremap_sizes, reduction_ratio


def generate_anchor(base_grid, base_interval):
    base_grid = np.array(base_grid)
    base_interval = np.array(list(base_interval) * 2)
    center_coord = np.array([*base_grid, *(base_grid + 1)])
    horizon_coord = center_coord + np.array([0, -1, 0, +1])
    vertical_coord = center_coord + np.array([-1, 0, +1, 0])
    large_coord = center_coord + np.array([-1, -1, 1, 1])
    anchors = np.vstack([center_coord, horizon_coord, vertical_coord, large_coord])
    return anchors * base_interval


def set_default_anchor_boxes(featuremap_sizes, reduction_ratio, input_size):
    anchors = []
    for f_size, r_ratio in zip(featuremap_sizes, reduction_ratio):
        base_grid_list = [[i, j] for i in range(f_size[0]) for j in range(f_size[1])]
        for base_grid in base_grid_list:
            anchors.append(generate_anchor(base_grid, r_ratio))
    anchors = np.vstack(anchors)
    return np.clip(anchors, 0, [*input_size, *input_size]).astype(np.float32)


# ----------------------------------------------------------------------------
# Forward pass: ONE pallas_call for the whole network
# ----------------------------------------------------------------------------
def ssd_forward(x_nchw, params, anchors, n_classes):
    b, _, h0, w0 = x_nchw.shape
    c = params["base_w"].shape[0]
    npc = 4 * (n_classes + 4)
    assert params["pred0_w"].shape[0] == npc and params["pred1_w"].shape[0] == npc

    # feature-map geometry for 3x3 / pad-1 convs: base (s2), extra (s2)
    h1, w1 = (h0 - 1) // 2 + 1, (w0 - 1) // 2 + 1
    h2, w2 = (h1 - 1) // 2 + 1, (w1 - 1) // 2 + 1
    wp0, wp1, wp2 = w0 + 2, w1 + 2, w2 + 2
    lp0, lp1, lp2 = (h0 + 3) * wp0, (h1 + 3) * wp1, (h2 + 3) * wp2
    m0, m1, m2 = h0 * wp0, h1 * wp1, h2 * wp2

    # operands: bf16 activations/weights, f32 biases / fused epilogues
    xf0 = _flat_padded_input(x_nchw)                               # (B, 8, Lp0)
    wmat0 = _weight_mat(params["base_w"])
    bias0 = params["base_b"].astype(jnp.float32).reshape(c, 1)
    bias1 = params["extra_b"].astype(jnp.float32).reshape(c, 1)
    wmat_f = jnp.concatenate([_weight_mat(params["extra_w"]),
                              _weight_mat(params["pred0_w"])], axis=0)
    wmat_p1 = _weight_mat(params["pred1_w"])
    sel0 = _decimation_matrix(h0, wp0, h1, w1, wp1)                # (M0, Lp1)
    sel1 = _decimation_matrix(h1, wp1, h2, w2, wp2)                # (M1, Lp2)
    epi0 = _pred_epilogue(params["pred0_b"], anchors[:h1 * w1 * 4], h1, w1, wp1)
    epi1 = _pred_epilogue(params["pred1_b"], anchors[h1 * w1 * 4:], h2, w2, wp2)

    dims = (wp0, m0, wp1, m1, wp2, m2, c)
    rep = lambda i: (0, 0)
    p0_pad, p1_pad = pl.pallas_call(
        functools.partial(_ssd_fused_kernel, dims),
        out_shape=(jax.ShapeDtypeStruct((b, npc, m1), jnp.float32),
                   jax.ShapeDtypeStruct((b, npc, m2), jnp.float32)),
        grid=(b,),
        in_specs=[
            pl.BlockSpec((1, _CIN_PAD, lp0), lambda i: (i, 0, 0)),   # input
            pl.BlockSpec((c, 9 * _CIN_PAD), rep),                    # base W
            pl.BlockSpec((c, 1), rep),                               # base b
            pl.BlockSpec((m0, lp1), rep),                            # decimate 0
            pl.BlockSpec((c + npc, 9 * _CIN_PAD), rep),              # extra|pred0 W
            pl.BlockSpec((c, 1), rep),                               # extra b
            pl.BlockSpec((npc, m1), rep),                            # pred0 bias+anchors
            pl.BlockSpec((m1, lp2), rep),                            # decimate 1
            pl.BlockSpec((npc, 9 * _CIN_PAD), rep),                  # pred1 W
            pl.BlockSpec((npc, m2), rep),                            # pred1 bias+anchors
        ],
        out_specs=(pl.BlockSpec((1, npc, m1), lambda i: (i, 0, 0)),
                   pl.BlockSpec((1, npc, m2), lambda i: (i, 0, 0))),
        compiler_params=pltpu.CompilerParams(
            dimension_semantics=("parallel",)),   # one image per TC on v7x
    )(xf0, wmat0, bias0, sel0, wmat_f, bias1, epi0, sel1, wmat_p1, epi1)

    # post-processing: pure layout (trim width pad, channels-last, split, concat)
    def _finalize(p_pad, hh, ww, wpad):
        p = p_pad.reshape(b, npc, hh, wpad)[:, :, :, :ww]
        return jnp.transpose(p, (0, 2, 3, 1)).reshape(b, hh * ww, npc)

    cls_list, reg_list = [], []
    for f in (_finalize(p0_pad, h1, w1, wp1), _finalize(p1_pad, h2, w2, wp2)):
        cls_list.append(f[:, :, :npc - 16].reshape(b, -1, n_classes))
        reg_list.append(f[:, :, npc - 16:].reshape(b, -1, 4))
    return jnp.concatenate(cls_list, axis=1), jnp.concatenate(reg_list, axis=1)


# ----------------------------------------------------------------------------
# Pure-JAX reference (mirrors the PyTorch module) for validation only
# ----------------------------------------------------------------------------
def _conv2d_ref(x_nhwc, w_oihw, bias, stride, relu):
    w_hwio = jnp.transpose(w_oihw, (2, 3, 1, 0))
    out = jax.lax.conv_general_dilated(
        x_nhwc, w_hwio, (stride, stride), [(1, 1), (1, 1)],
        dimension_numbers=("NHWC", "HWIO", "NHWC"))
    out = out + bias[None, None, None, :]
    return jnp.maximum(out, 0.0) if relu else out


def ssd_forward_ref(x_nchw, params, anchors, n_classes):
    x = jnp.transpose(x_nchw, (0, 2, 3, 1))
    b = x.shape[0]
    npc = 4 * (n_classes + 4)
    fmaps = [_conv2d_ref(x, params["base_w"], params["base_b"], 2, True)]
    fmaps.append(_conv2d_ref(fmaps[-1], params["extra_w"], params["extra_b"], 2, True))
    preds = [_conv2d_ref(fmaps[0], params["pred0_w"], params["pred0_b"], 1, False),
             _conv2d_ref(fmaps[1], params["pred1_w"], params["pred1_b"], 1, False)]
    cls_list, reg_list = [], []
    for f in preds:
        f = f.reshape(b, -1, npc)
        cls_list.append(f[:, :, :-16].reshape(b, -1, n_classes))
        reg_list.append(f[:, :, -16:].reshape(b, -1, 4))
    cls = jnp.concatenate(cls_list, axis=1)
    reg = jnp.concatenate(reg_list, axis=1) + anchors[None, :, :]
    return cls, reg


# ----------------------------------------------------------------------------
# Main
# ----------------------------------------------------------------------------
if __name__ == "__main__":
    n_classes = 3
    input_size = (16, 16)
    C = 8                               # hidden channels of base / extra layers
    pred_ch = 4 * (n_classes + 4)       # 28

    key = jax.random.PRNGKey(0)
    ks = jax.random.split(key, 9)
    params = {
        "base_w": jax.random.normal(ks[0], (C, 3, 3, 3), jnp.float32) * 0.1,
        "base_b": jax.random.normal(ks[1], (C,), jnp.float32) * 0.1,
        "extra_w": jax.random.normal(ks[2], (C, C, 3, 3), jnp.float32) * 0.1,
        "extra_b": jax.random.normal(ks[3], (C,), jnp.float32) * 0.1,
        "pred0_w": jax.random.normal(ks[4], (pred_ch, C, 3, 3), jnp.float32) * 0.1,
        "pred0_b": jax.random.normal(ks[5], (pred_ch,), jnp.float32) * 0.1,
        "pred1_w": jax.random.normal(ks[6], (pred_ch, C, 3, 3), jnp.float32) * 0.1,
        "pred1_b": jax.random.normal(ks[7], (pred_ch,), jnp.float32) * 0.1,
    }

    # init-time anchor / feature-map bookkeeping (host numpy, as in PyTorch)
    fmap_sizes, red_ratio = set_featuremap_sizes(input_size, conv_strides=(2, 2))
    anchors = jnp.asarray(set_default_anchor_boxes(fmap_sizes, red_ratio, input_size))

    # input (NCHW, like PyTorch)
    x = jax.random.normal(ks[8], (2, 3, *input_size), jnp.float32)

    fwd = jax.jit(functools.partial(ssd_forward, n_classes=n_classes))
    cls_score, reg_coord = jax.block_until_ready(fwd(x, params, anchors))

    # validate against the pure-JAX reference (bf16 MXU operands -> ~1e-2 tol)
    cls_ref, reg_ref = ssd_forward_ref(x, params, anchors, n_classes)

    assert cls_score.shape == (2, 320, n_classes), cls_score.shape
    assert reg_coord.shape == (2, 320, 4), reg_coord.shape
    np.testing.assert_allclose(np.asarray(cls_score), np.asarray(cls_ref),
                               rtol=1e-2, atol=1e-2)
    np.testing.assert_allclose(np.asarray(reg_coord), np.asarray(reg_ref),
                               rtol=1e-2, atol=1e-2)

    print("KERNEL_OK")
</pallas_src>

<mosaic_0001>
module attributes {stable_mosaic.version = 11 : i64} {
  func.func @_ssd_fused_kernel(%arg0: i32, %arg1: memref<1x8x342xbf16, #tpu.memory_space<vmem>>, %arg2: memref<8x72xbf16, #tpu.memory_space<vmem>>, %arg3: memref<8x1xf32, #tpu.memory_space<vmem>>, %arg4: memref<288x110xbf16, #tpu.memory_space<vmem>>, %arg5: memref<36x72xbf16, #tpu.memory_space<vmem>>, %arg6: memref<8x1xf32, #tpu.memory_space<vmem>>, %arg7: memref<28x80xf32, #tpu.memory_space<vmem>>, %arg8: memref<80x42xbf16, #tpu.memory_space<vmem>>, %arg9: memref<28x72xbf16, #tpu.memory_space<vmem>>, %arg10: memref<28x24xf32, #tpu.memory_space<vmem>>, %arg11: memref<1x28x80xf32, #tpu.memory_space<vmem>>, %arg12: memref<1x28x24xf32, #tpu.memory_space<vmem>>) attributes {dimension_semantics = [#tpu.dimension_semantics<parallel>], iteration_bounds = array<i64: 2>, scalar_prefetch = 0 : i64, scratch_operands = 0 : i64, tpu.core_type = #tpu.core_type<tc>, window_params = [{transform_indices = @transform_0, window_bounds = array<i64: 1, 8, 342>}, {pipeline_mode = #tpu.pipeline_mode<synchronous>, transform_indices = @transform_1, window_bounds = array<i64: 8, 72>}, {pipeline_mode = #tpu.pipeline_mode<synchronous>, transform_indices = @transform_2, window_bounds = array<i64: 8, 1>}, {pipeline_mode = #tpu.pipeline_mode<synchronous>, transform_indices = @transform_3, window_bounds = array<i64: 288, 110>}, {pipeline_mode = #tpu.pipeline_mode<synchronous>, transform_indices = @transform_4, window_bounds = array<i64: 36, 72>}, {pipeline_mode = #tpu.pipeline_mode<synchronous>, transform_indices = @transform_5, window_bounds = array<i64: 8, 1>}, {pipeline_mode = #tpu.pipeline_mode<synchronous>, transform_indices = @transform_6, window_bounds = array<i64: 28, 80>}, {pipeline_mode = #tpu.pipeline_mode<synchronous>, transform_indices = @transform_7, window_bounds = array<i64: 80, 42>}, {pipeline_mode = #tpu.pipeline_mode<synchronous>, transform_indices = @transform_8, window_bounds = array<i64: 28, 72>}, {pipeline_mode = #tpu.pipeline_mode<synchronous>, transform_indices = @transform_9, window_bounds = array<i64: 28, 24>}, {transform_indices = @transform_10, window_bounds = array<i64: 1, 28, 80>}, {transform_indices = @transform_11, window_bounds = array<i64: 1, 28, 24>}]} {
    %c0 = arith.constant 0 : index
    %c0_0 = arith.constant 0 : index
    %c0_1 = arith.constant 0 : index
    %0 = vector.load %arg1[%c0, %c0_0, %c0_1] : memref<1x8x342xbf16, #tpu.memory_space<vmem>>, vector<1x8x342xbf16>
    %1 = vector.shape_cast %0 : vector<1x8x342xbf16> to vector<8x342xbf16>
    %2 = vector.extract_strided_slice %1 {offsets = [0, 0], sizes = [8, 288], strides = [1, 1]} : vector<8x342xbf16> to vector<8x288xbf16>
    %3 = vector.extract_strided_slice %1 {offsets = [0, 1], sizes = [8, 288], strides = [1, 1]} : vector<8x342xbf16> to vector<8x288xbf16>
    %4 = vector.extract_strided_slice %1 {offsets = [0, 2], sizes = [8, 288], strides = [1, 1]} : vector<8x342xbf16> to vector<8x288xbf16>
    %5 = vector.extract_strided_slice %1 {offsets = [0, 18], sizes = [8, 288], strides = [1, 1]} : vector<8x342xbf16> to vector<8x288xbf16>
    %6 = vector.extract_strided_slice %1 {offsets = [0, 19], sizes = [8, 288], strides = [1, 1]} : vector<8x342xbf16> to vector<8x288xbf16>
    %7 = vector.extract_strided_slice %1 {offsets = [0, 20], sizes = [8, 288], strides = [1, 1]} : vector<8x342xbf16> to vector<8x288xbf16>
    %8 = vector.extract_strided_slice %1 {offsets = [0, 36], sizes = [8, 288], strides = [1, 1]} : vector<8x342xbf16> to vector<8x288xbf16>
    %9 = vector.extract_strided_slice %1 {offsets = [0, 37], sizes = [8, 288], strides = [1, 1]} : vector<8x342xbf16> to vector<8x288xbf16>
    %10 = vector.extract_strided_slice %1 {offsets = [0, 38], sizes = [8, 288], strides = [1, 1]} : vector<8x342xbf16> to vector<8x288xbf16>
    %11 = tpu.concatenate %2, %3, %4, %5, %6, %7, %8, %9, %10 in 0 : vector<8x288xbf16>, vector<8x288xbf16>, vector<8x288xbf16>, vector<8x288xbf16>, vector<8x288xbf16>, vector<8x288xbf16>, vector<8x288xbf16>, vector<8x288xbf16>, vector<8x288xbf16> -> vector<72x288xbf16>
    %c0_2 = arith.constant 0 : index
    %c0_3 = arith.constant 0 : index
    %12 = vector.load %arg2[%c0_2, %c0_3] : memref<8x72xbf16, #tpu.memory_space<vmem>>, vector<8x72xbf16>
    %cst = arith.constant dense<0.000000e+00> : vector<8x288xf32>
    %13 = tpu.matmul %12, %11, %cst {dimension_numbers = #tpu.dot_dimension_numbers<[1], [0], [0], [1], [0, 0, 1, 1], [], []>} : vector<8x72xbf16>, vector<72x288xbf16>, vector<8x288xf32> -> vector<8x288xf32>
    %c0_4 = arith.constant 0 : index
    %c0_5 = arith.constant 0 : index
    %14 = vector.load %arg3[%c0_4, %c0_5] : memref<8x1xf32, #tpu.memory_space<vmem>>, vector<8x1xf32>
    %15 = vector.broadcast %14 : vector<8x1xf32> to vector<8x288xf32>
    %16 = arith.addf %13, %15 : vector<8x288xf32>
    %cst_6 = arith.constant 0.000000e+00 : f32
    %17 = vector.broadcast %cst_6 : f32 to vector<8x288xf32>
    %18 = arith.maximumf %16, %17 : vector<8x288xf32>
    %19 = arith.truncf %18 : vector<8x288xf32> to vector<8x288xbf16>
    %c0_7 = arith.constant 0 : index
    %c0_8 = arith.constant 0 : index
    %20 = vector.load %arg4[%c0_7, %c0_8] : memref<288x110xbf16, #tpu.memory_space<vmem>>, vector<288x110xbf16>
    %cst_9 = arith.constant dense<0.000000e+00> : vector<8x110xf32>
    %21 = tpu.matmul %19, %20, %cst_9 {dimension_numbers = #tpu.dot_dimension_numbers<[1], [0], [0], [1], [0, 0, 1, 1], [], []>} : vector<8x288xbf16>, vector<288x110xbf16>, vector<8x110xf32> -> vector<8x110xf32>
    %22 = arith.truncf %21 : vector<8x110xf32> to vector<8x110xbf16>
    %23 = vector.extract_strided_slice %22 {offsets = [0, 0], sizes = [8, 80], strides = [1, 1]} : vector<8x110xbf16> to vector<8x80xbf16>
    %24 = vector.extract_strided_slice %22 {offsets = [0, 1], sizes = [8, 80], strides = [1, 1]} : vector<8x110xbf16> to vector<8x80xbf16>
    %25 = vector.extract_strided_slice %22 {offsets = [0, 2], sizes = [8, 80], strides = [1, 1]} : vector<8x110xbf16> to vector<8x80xbf16>
    %26 = vector.extract_strided_slice %22 {offsets = [0, 10], sizes = [8, 80], strides = [1, 1]} : vector<8x110xbf16> to vector<8x80xbf16>
    %27 = vector.extract_strided_slice %22 {offsets = [0, 11], sizes = [8, 80], strides = [1, 1]} : vector<8x110xbf16> to vector<8x80xbf16>
    %28 = vector.extract_strided_slice %22 {offsets = [0, 12], sizes = [8, 80], strides = [1, 1]} : vector<8x110xbf16> to vector<8x80xbf16>
    %29 = vector.extract_strided_slice %22 {offsets = [0, 20], sizes = [8, 80], strides = [1, 1]} : vector<8x110xbf16> to vector<8x80xbf16>
    %30 = vector.extract_strided_slice %22 {offsets = [0, 21], sizes = [8, 80], strides = [1, 1]} : vector<8x110xbf16> to vector<8x80xbf16>
    %31 = vector.extract_strided_slice %22 {offsets = [0, 22], sizes = [8, 80], strides = [1, 1]} : vector<8x110xbf16> to vector<8x80xbf16>
    %32 = tpu.concatenate %23, %24, %25, %26, %27, %28, %29, %30, %31 in 0 : vector<8x80xbf16>, vector<8x80xbf16>, vector<8x80xbf16>, vector<8x80xbf16>, vector<8x80xbf16>, vector<8x80xbf16>, vector<8x80xbf16>, vector<8x80xbf16>, vector<8x80xbf16> -> vector<72x80xbf16>
    %c0_10 = arith.constant 0 : index
    %c0_11 = arith.constant 0 : index
    %33 = vector.load %arg5[%c0_10, %c0_11] : memref<36x72xbf16, #tpu.memory_space<vmem>>, vector<36x72xbf16>
    %cst_12 = arith.constant dense<0.000000e+00> : vector<36x80xf32>
    %34 = tpu.matmul %33, %32, %cst_12 {dimension_numbers = #tpu.dot_dimension_numbers<[1], [0], [0], [1], [0, 0, 1, 1], [], []>} : vector<36x72xbf16>, vector<72x80xbf16>, vector<36x80xf32> -> vector<36x80xf32>
    %35 = vector.extract_strided_slice %34 {offsets = [0, 0], sizes = [8, 80], strides = [1, 1]} : vector<36x80xf32> to vector<8x80xf32>
    %c0_13 = arith.constant 0 : index
    %c0_14 = arith.constant 0 : index
    %36 = vector.load %arg6[%c0_13, %c0_14] : memref<8x1xf32, #tpu.memory_space<vmem>>, vector<8x1xf32>
    %37 = vector.broadcast %36 : vector<8x1xf32> to vector<8x80xf32>
    %38 = arith.addf %35, %37 : vector<8x80xf32>
    %cst_15 = arith.constant 0.000000e+00 : f32
    %39 = vector.broadcast %cst_15 : f32 to vector<8x80xf32>
    %40 = arith.maximumf %38, %39 : vector<8x80xf32>
    %41 = arith.truncf %40 : vector<8x80xf32> to vector<8x80xbf16>
    %42 = vector.extract_strided_slice %34 {offsets = [8, 0], sizes = [28, 80], strides = [1, 1]} : vector<36x80xf32> to vector<28x80xf32>
    %c0_16 = arith.constant 0 : index
    %c0_17 = arith.constant 0 : index
    %43 = vector.load %arg7[%c0_16, %c0_17] : memref<28x80xf32, #tpu.memory_space<vmem>>, vector<28x80xf32>
    %44 = arith.addf %42, %43 : vector<28x80xf32>
    %c0_18 = arith.constant 0 : index
    %c0_19 = arith.constant 0 : index
    %c0_20 = arith.constant 0 : index
    %45 = vector.load %arg11[%c0_18, %c0_19, %c0_20] : memref<1x28x80xf32, #tpu.memory_space<vmem>>, vector<1x28x80xf32>
    %46 = vector.shape_cast %45 : vector<1x28x80xf32> to vector<28x80xf32>
    %47 = vector.shape_cast %44 : vector<28x80xf32> to vector<1x28x80xf32>
    tpu.vector_store %arg11[%c0_18, %c0_19, %c0_20], %47 {strides = array<i32>} : memref<1x28x80xf32, #tpu.memory_space<vmem>>, vector<1x28x80xf32>,
    %c0_21 = arith.constant 0 : index
    %c0_22 = arith.constant 0 : index
    %48 = vector.load %arg8[%c0_21, %c0_22] : memref<80x42xbf16, #tpu.memory_space<vmem>>, vector<80x42xbf16>
    %cst_23 = arith.constant dense<0.000000e+00> : vector<8x42xf32>
    %49 = tpu.matmul %41, %48, %cst_23 {dimension_numbers = #tpu.dot_dimension_numbers<[1], [0], [0], [1], [0, 0, 1, 1], [], []>} : vector<8x80xbf16>, vector<80x42xbf16>, vector<8x42xf32> -> vector<8x42xf32>
    %50 = arith.truncf %49 : vector<8x42xf32> to vector<8x42xbf16>
    %51 = vector.extract_strided_slice %50 {offsets = [0, 0], sizes = [8, 24], strides = [1, 1]} : vector<8x42xbf16> to vector<8x24xbf16>
    %52 = vector.extract_strided_slice %50 {offsets = [0, 1], sizes = [8, 24], strides = [1, 1]} : vector<8x42xbf16> to vector<8x24xbf16>
    %53 = vector.extract_strided_slice %50 {offsets = [0, 2], sizes = [8, 24], strides = [1, 1]} : vector<8x42xbf16> to vector<8x24xbf16>
    %54 = vector.extract_strided_slice %50 {offsets = [0, 6], sizes = [8, 24], strides = [1, 1]} : vector<8x42xbf16> to vector<8x24xbf16>
    %55 = vector.extract_strided_slice %50 {offsets = [0, 7], sizes = [8, 24], strides = [1, 1]} : vector<8x42xbf16> to vector<8x24xbf16>
    %56 = vector.extract_strided_slice %50 {offsets = [0, 8], sizes = [8, 24], strides = [1, 1]} : vector<8x42xbf16> to vector<8x24xbf16>
    %57 = vector.extract_strided_slice %50 {offsets = [0, 12], sizes = [8, 24], strides = [1, 1]} : vector<8x42xbf16> to vector<8x24xbf16>
    %58 = vector.extract_strided_slice %50 {offsets = [0, 13], sizes = [8, 24], strides = [1, 1]} : vector<8x42xbf16> to vector<8x24xbf16>
    %59 = vector.extract_strided_slice %50 {offsets = [0, 14], sizes = [8, 24], strides = [1, 1]} : vector<8x42xbf16> to vector<8x24xbf16>
    %60 = tpu.concatenate %51, %52, %53, %54, %55, %56, %57, %58, %59 in 0 : vector<8x24xbf16>, vector<8x24xbf16>, vector<8x24xbf16>, vector<8x24xbf16>, vector<8x24xbf16>, vector<8x24xbf16>, vector<8x24xbf16>, vector<8x24xbf16>, vector<8x24xbf16> -> vector<72x24xbf16>
    %c0_24 = arith.constant 0 : index
    %c0_25 = arith.constant 0 : index
    %61 = vector.load %arg9[%c0_24, %c0_25] : memref<28x72xbf16, #tpu.memory_space<vmem>>, vector<28x72xbf16>
    %cst_26 = arith.constant dense<0.000000e+00> : vector<28x24xf32>
    %62 = tpu.matmul %61, %60, %cst_26 {dimension_numbers = #tpu.dot_dimension_numbers<[1], [0], [0], [1], [0, 0, 1, 1], [], []>} : vector<28x72xbf16>, vector<72x24xbf16>, vector<28x24xf32> -> vector<28x24xf32>
    %c0_27 = arith.constant 0 : index
    %c0_28 = arith.constant 0 : index
    %63 = vector.load %arg10[%c0_27, %c0_28] : memref<28x24xf32, #tpu.memory_space<vmem>>, vector<28x24xf32>
    %64 = arith.addf %62, %63 : vector<28x24xf32>
    %c0_29 = arith.constant 0 : index
    %c0_30 = arith.constant 0 : index
    %c0_31 = arith.constant 0 : index
    %65 = vector.load %arg12[%c0_29, %c0_30, %c0_31] : memref<1x28x24xf32, #tpu.memory_space<vmem>>, vector<1x28x24xf32>
    %66 = vector.shape_cast %65 : vector<1x28x24xf32> to vector<28x24xf32>
    %67 = vector.shape_cast %64 : vector<28x24xf32> to vector<1x28x24xf32>
    tpu.vector_store %arg12[%c0_29, %c0_30, %c0_31], %67 {strides = array<i32>} : memref<1x28x24xf32, #tpu.memory_space<vmem>>, vector<1x28x24xf32>,
    return
  }
  func.func @transform_0(%arg0: i32) -> (i32, i32, i32) {
    %c0_i32 = arith.constant 0 : i32
    %c0_i32_0 = arith.constant 0 : i32
    %c0_i32_1 = arith.constant 0 : i32
    return %arg0, %c0_i32, %c0_i32_0 : i32, i32, i32
  }
  func.func @transform_1(%arg0: i32) -> (i32, i32) {
    %c0_i32 = arith.constant 0 : i32
    %c0_i32_0 = arith.constant 0 : i32
    %c0_i32_1 = arith.constant 0 : i32
    return %c0_i32, %c0_i32_0 : i32, i32
  }
  func.func @transform_2(%arg0: i32) -> (i32, i32) {
    %c0_i32 = arith.constant 0 : i32
    %c0_i32_0 = arith.constant 0 : i32
    %c0_i32_1 = arith.constant 0 : i32
    return %c0_i32, %c0_i32_0 : i32, i32
  }
  func.func @transform_3(%arg0: i32) -> (i32, i32) {
    %c0_i32 = arith.constant 0 : i32
    %c0_i32_0 = arith.constant 0 : i32
    %c0_i32_1 = arith.constant 0 : i32
    return %c0_i32, %c0_i32_0 : i32, i32
  }
  func.func @transform_4(%arg0: i32) -> (i32, i32) {
    %c0_i32 = arith.constant 0 : i32
    %c0_i32_0 = arith.constant 0 : i32
    %c0_i32_1 = arith.constant 0 : i32
    return %c0_i32, %c0_i32_0 : i32, i32
  }
  func.func @transform_5(%arg0: i32) -> (i32, i32) {
    %c0_i32 = arith.constant 0 : i32
    %c0_i32_0 = arith.constant 0 : i32
    %c0_i32_1 = arith.constant 0 : i32
    return %c0_i32, %c0_i32_0 : i32, i32
  }
  func.func @transform_6(%arg0: i32) -> (i32, i32) {
    %c0_i32 = arith.constant 0 : i32
    %c0_i32_0 = arith.constant 0 : i32
    %c0_i32_1 = arith.constant 0 : i32
    return %c0_i32, %c0_i32_0 : i32, i32
  }
  func.func @transform_7(%arg0: i32) -> (i32, i32) {
    %c0_i32 = arith.constant 0 : i32
    %c0_i32_0 = arith.constant 0 : i32
    %c0_i32_1 = arith.constant 0 : i32
    return %c0_i32, %c0_i32_0 : i32, i32
  }
  func.func @transform_8(%arg0: i32) -> (i32, i32) {
    %c0_i32 = arith.constant 0 : i32
    %c0_i32_0 = arith.constant 0 : i32
    %c0_i32_1 = arith.constant 0 : i32
    return %c0_i32, %c0_i32_0 : i32, i32
  }
  func.func @transform_9(%arg0: i32) -> (i32, i32) {
    %c0_i32 = arith.constant 0 : i32
    %c0_i32_0 = arith.constant 0 : i32
    %c0_i32_1 = arith.constant 0 : i32
    return %c0_i32, %c0_i32_0 : i32, i32
  }
  func.func @transform_10(%arg0: i32) -> (i32, i32, i32) {
    %c0_i32 = arith.constant 0 : i32
    %c0_i32_0 = arith.constant 0 : i32
    %c0_i32_1 = arith.constant 0 : i32
    return %arg0, %c0_i32, %c0_i32_0 : i32, i32, i32
  }
  func.func @transform_11(%arg0: i32) -> (i32, i32, i32) {
    %c0_i32 = arith.constant 0 : i32
    %c0_i32_0 = arith.constant 0 : i32
    %c0_i32_1 = arith.constant 0 : i32
    return %arg0, %c0_i32, %c0_i32_0 : i32, i32, i32
  }
}

</mosaic_0001>

<llo_original>
// kernel: ssd_forward.1
$region0: #{ssd_forward.1}
  #allocation0 [shape = 'u32[]', space=smem, size = 0x4, offset = 0x4, fixed_abs, tag = 'smem constant byte address 0x4 - core index']
  #allocation1 [shape = 'u32[72,128]{1,0:T(1,128)}', space=vmem, size = 0x9000, scoped, tag = 'internal scratch']
  %s0 = inlined_call_operand.vmem [shape: bf16[2,8,342], index: 0, kind: input, shape index: {}]
  %s1 = inlined_call_operand.vmem [shape: bf16[8,72], index: 1, kind: input, shape index: {}]
  %s2 = inlined_call_operand.vmem [shape: f32[8,1], index: 2, kind: input, shape index: {}]
  %s3 = inlined_call_operand.vmem [shape: bf16[288,110], index: 3, kind: input, shape index: {}]
  %s4 = inlined_call_operand.vmem [shape: bf16[36,72], index: 4, kind: input, shape index: {}]
  %s5 = inlined_call_operand.vmem [shape: f32[8,1], index: 5, kind: input, shape index: {}]
  %s6 = inlined_call_operand.vmem [shape: f32[28,80], index: 6, kind: input, shape index: {}]
  %s7 = inlined_call_operand.vmem [shape: bf16[80,42], index: 7, kind: input, shape index: {}]
  %s8 = inlined_call_operand.vmem [shape: bf16[28,72], index: 8, kind: input, shape index: {}]
  %s9 = inlined_call_operand.vmem [shape: f32[28,24], index: 9, kind: input, shape index: {}]
  %s10 = inlined_call_operand.vmem [shape: f32[2,28,80], index: 10, kind: output, shape index: {0}]
  %s11 = inlined_call_operand.vmem [shape: f32[2,28,24], index: 11, kind: output, shape index: {1}]
  %12 = xla_tuple %s10, %s11
  %s13 = sld [smem:[#allocation0]]
  $region81: #{ssd_forward.1} parent=0
    _
  %s15 = ssub.s32 1, %s13
  %s16 = scalar_select 0, %s15, %s13
  loop: start=0, step=1, limit=4
  $region2: #{ssd_forward.1} parent=0 // loop_pre_header
    _
  $region3: #{ssd_forward.1} parent=0 // loop_header
    %s18 = sphi 0, %s22
    %p19 = scmp.ge.s32.totalorder %s18, 4
    %s28 = sphi 0, %s30
    %s31 = sphi 0, %s28
    %s32 = sphi 0, %s31
    %s48 = sphi 0, %s32
    %s52 = sphi 0, %s52
    %s54 = sphi 0, %s52
    %s55 = sphi 0, %s54
    %s69 = sphi 0, %s55
    %s73 = sphi 0, %s73
    %s75 = sphi 0, %s73
    %s76 = sphi 0, %s75
    %s90 = sphi 0, %s76
    %s94 = sphi 0, %s94
    %s96 = sphi 0, %s94
    %s97 = sphi 0, %s96
    %s111 = sphi 0, %s97
    %s115 = sphi 0, %s115
    %s117 = sphi 0, %s115
    %s118 = sphi 0, %s117
    %s132 = sphi 0, %s118
    %s136 = sphi 0, %s136
    %s138 = sphi 0, %s136
    %s139 = sphi 0, %s138
    %s153 = sphi 0, %s139
    %s157 = sphi 0, %s157
    %s159 = sphi 0, %s157
    %s160 = sphi 0, %s159
    %s174 = sphi 0, %s160
    %s178 = sphi 0, %s178
    %s180 = sphi 0, %s178
    %s181 = sphi 0, %s180
    %s195 = sphi 0, %s181
    %s199 = sphi 0, %s199
    %s201 = sphi 0, %s199
    %s202 = sphi 0, %s201
    %s216 = sphi 0, %s202
    %s220 = sphi 0, %s220
    %s222 = sphi 0, %s220
    %s223 = sphi 0, %s222
    %s237 = sphi 0, %s223
    %s243 = sphi 0, %s245
    %s246 = sphi 0, %s243
    %s247 = sphi 0, %s246
    %s263 = sphi 0, %s247
    %s269 = sphi 0, %s271
    %s272 = sphi 0, %s269
    %s273 = sphi 0, %s272
    %s289 = sphi 0, %s273
  $region4: #{ssd_forward.1} parent=0 // loop_header_branch
    %21 = sbr.rel (%p19) target = $region8
  $region5: #{ssd_forward.1} parent=0 // loop_body
    %s23 = ssub.s32 %s18, 1
    %s24 = ssub.s32 %s18, 2
    %s25 = sadd.s32 %s18, 1
    %s26 = ssub.s32 %s18, %s25
    %p27 = scmp.eq.s32.totalorder %s26, 0
    %s29 = sadd.s32 %s28, 1
    %s30 = scalar_select %p27, %s28, %s29
    %p33 = pneg %p27
    %p34 = scmp.eq.s32.totalorder %s18, 1
    %p35 = por %p33, %p34
    %p36 = scmp.ne.s32.totalorder %s28, %s31
    %p37 = scmp.eq.s32.totalorder %s18, 0
    %p38 = por %p36, %p37
    %p39 = scmp.ne.s32.totalorder %s28, %s31
    %p40 = scmp.eq.s32.totalorder %s23, 1
    %p41 = por %p39, %p40
    %p42 = scmp.ne.s32.totalorder %s31, %s32
    %p43 = scmp.eq.s32.totalorder %s23, 0
    %p44 = por %p42, %p43
    %p45 = scmp.ne.s32.totalorder %s31, %s32
    %p46 = scmp.eq.s32.totalorder %s24, 1
    %p47 = por %p45, %p46
    %p49 = scmp.ne.s32.totalorder %s32, %s48
    %p50 = scmp.eq.s32.totalorder %s24, 0
    %p51 = por %p49, %p50
    %s53 = sadd.s32 %s52, 1
    %p56 = scmp.eq.s32.totalorder %s18, 1
    %p57 = scmp.ne.s32.totalorder %s52, %s54
    %p58 = scmp.eq.s32.totalorder %s18, 0
    %p59 = por %p57, %p58
    %p60 = scmp.ne.s32.totalorder %s52, %s54
    %p61 = scmp.eq.s32.totalorder %s23, 1
    %p62 = por %p60, %p61
    %p63 = scmp.ne.s32.totalorder %s54, %s55
    %p64 = scmp.eq.s32.totalorder %s23, 0
    %p65 = por %p63, %p64
    %p66 = scmp.ne.s32.totalorder %s54, %s55
    %p67 = scmp.eq.s32.totalorder %s24, 1
    %p68 = por %p66, %p67
    %p70 = scmp.ne.s32.totalorder %s55, %s69
    %p71 = scmp.eq.s32.totalorder %s24, 0
    %p72 = por %p70, %p71
    %s74 = sadd.s32 %s73, 1
    %p77 = scmp.eq.s32.totalorder %s18, 1
    %p78 = scmp.ne.s32.totalorder %s73, %s75
    %p79 = scmp.eq.s32.totalorder %s18, 0
    %p80 = por %p78, %p79
    %p81 = scmp.ne.s32.totalorder %s73, %s75
    %p82 = scmp.eq.s32.totalorder %s23, 1
    %p83 = por %p81, %p82
    %p84 = scmp.ne.s32.totalorder %s75, %s76
    %p85 = scmp.eq.s32.totalorder %s23, 0
    %p86 = por %p84, %p85
    %p87 = scmp.ne.s32.totalorder %s75, %s76
    %p88 = scmp.eq.s32.totalorder %s24, 1
    %p89 = por %p87, %p88
    %p91 = scmp.ne.s32.totalorder %s76, %s90
    %p92 = scmp.eq.s32.totalorder %s24, 0
    %p93 = por %p91, %p92
    %s95 = sadd.s32 %s94, 1
    %p98 = scmp.eq.s32.totalorder %s18, 1
    %p99 = scmp.ne.s32.totalorder %s94, %s96
    %p100 = scmp.eq.s32.totalorder %s18, 0
    %p101 = por %p99, %p100
    %p102 = scmp.ne.s32.totalorder %s94, %s96
    %p103 = scmp.eq.s32.totalorder %s23, 1
    %p104 = por %p102, %p103
    %p105 = scmp.ne.s32.totalorder %s96, %s97
    %p106 = scmp.eq.s32.totalorder %s23, 0
    %p107 = por %p105, %p106
    %p108 = scmp.ne.s32.totalorder %s96, %s97
    %p109 = scmp.eq.s32.totalorder %s24, 1
    %p110 = por %p108, %p109
    %p112 = scmp.ne.s32.totalorder %s97, %s111
    %p113 = scmp.eq.s32.totalorder %s24, 0
    %p114 = por %p112, %p113
    %s116 = sadd.s32 %s115, 1
    %p119 = scmp.eq.s32.totalorder %s18, 1
    %p120 = scmp.ne.s32.totalorder %s115, %s117
    %p121 = scmp.eq.s32.totalorder %s18, 0
    %p122 = por %p120, %p121
    %p123 = scmp.ne.s32.totalorder %s115, %s117
    %p124 = scmp.eq.s32.totalorder %s23, 1
    %p125 = por %p123, %p124
    %p126 = scmp.ne.s32.totalorder %s117, %s118
    %p127 = scmp.eq.s32.totalorder %s23, 0
    %p128 = por %p126, %p127
    %p129 = scmp.ne.s32.totalorder %s117, %s118
    %p130 = scmp.eq.s32.totalorder %s24, 1
    %p131 = por %p129, %p130
    %p133 = scmp.ne.s32.totalorder %s118, %s132
    %p134 = scmp.eq.s32.totalorder %s24, 0
    %p135 = por %p133, %p134
    %s137 = sadd.s32 %s136, 1
    %p140 = scmp.eq.s32.totalorder %s18, 1
    %p141 = scmp.ne.s32.totalorder %s136, %s138
    %p142 = scmp.eq.s32.totalorder %s18, 0
    %p143 = por %p141, %p142
    %p144 = scmp.ne.s32.totalorder %s136, %s138
    %p145 = scmp.eq.s32.totalorder %s23, 1
    %p146 = por %p144, %p145
    %p147 = scmp.ne.s32.totalorder %s138, %s139
    %p148 = scmp.eq.s32.totalorder %s23, 0
    %p149 = por %p147, %p148
    %p150 = scmp.ne.s32.totalorder %s138, %s139
    %p151 = scmp.eq.s32.totalorder %s24, 1
    %p152 = por %p150, %p151
    %p154 = scmp.ne.s32.totalorder %s139, %s153
    %p155 = scmp.eq.s32.totalorder %s24, 0
    %p156 = por %p154, %p155
    %s158 = sadd.s32 %s157, 1
    %p161 = scmp.eq.s32.totalorder %s18, 1
    %p162 = scmp.ne.s32.totalorder %s157, %s159
    %p163 = scmp.eq.s32.totalorder %s18, 0
    %p164 = por %p162, %p163
    %p165 = scmp.ne.s32.totalorder %s157, %s159
    %p166 = scmp.eq.s32.totalorder %s23, 1
    %p167 = por %p165, %p166
    %p168 = scmp.ne.s32.totalorder %s159, %s160
    %p169 = scmp.eq.s32.totalorder %s23, 0
    %p170 = por %p168, %p169
    %p171 = scmp.ne.s32.totalorder %s159, %s160
    %p172 = scmp.eq.s32.totalorder %s24, 1
    %p173 = por %p171, %p172
    %p175 = scmp.ne.s32.totalorder %s160, %s174
    %p176 = scmp.eq.s32.totalorder %s24, 0
    %p177 = por %p175, %p176
    %s179 = sadd.s32 %s178, 1
    %p182 = scmp.eq.s32.totalorder %s18, 1
    %p183 = scmp.ne.s32.totalorder %s178, %s180
    %p184 = scmp.eq.s32.totalorder %s18, 0
    %p185 = por %p183, %p184
    %p186 = scmp.ne.s32.totalorder %s178, %s180
    %p187 = scmp.eq.s32.totalorder %s23, 1
    %p188 = por %p186, %p187
    %p189 = scmp.ne.s32.totalorder %s180, %s181
    %p190 = scmp.eq.s32.totalorder %s23, 0
    %p191 = por %p189, %p190
    %p192 = scmp.ne.s32.totalorder %s180, %s181
    %p193 = scmp.eq.s32.totalorder %s24, 1
    %p194 = por %p192, %p193
    %p196 = scmp.ne.s32.totalorder %s181, %s195
    %p197 = scmp.eq.s32.totalorder %s24, 0
    %p198 = por %p196, %p197
    %s200 = sadd.s32 %s199, 1
    %p203 = scmp.eq.s32.totalorder %s18, 1
    %p204 = scmp.ne.s32.totalorder %s199, %s201
    %p205 = scmp.eq.s32.totalorder %s18, 0
    %p206 = por %p204, %p205
    %p207 = scmp.ne.s32.totalorder %s199, %s201
    %p208 = scmp.eq.s32.totalorder %s23, 1
    %p209 = por %p207, %p208
    %p210 = scmp.ne.s32.totalorder %s201, %s202
    %p211 = scmp.eq.s32.totalorder %s23, 0
    %p212 = por %p210, %p211
    %p213 = scmp.ne.s32.totalorder %s201, %s202
    %p214 = scmp.eq.s32.totalorder %s24, 1
    %p215 = por %p213, %p214
    %p217 = scmp.ne.s32.totalorder %s202, %s216
    %p218 = scmp.eq.s32.totalorder %s24, 0
    %p219 = por %p217, %p218
    %s221 = sadd.s32 %s220, 1
    %p224 = scmp.eq.s32.totalorder %s18, 1
    %p225 = scmp.ne.s32.totalorder %s220, %s222
    %p226 = scmp.eq.s32.totalorder %s18, 0
    %p227 = por %p225, %p226
    %p228 = scmp.ne.s32.totalorder %s220, %s222
    %p229 = scmp.eq.s32.totalorder %s23, 1
    %p230 = por %p228, %p229
    %p231 = scmp.ne.s32.totalorder %s222, %s223
    %p232 = scmp.eq.s32.totalorder %s23, 0
    %p233 = por %p231, %p232
    %p234 = scmp.ne.s32.totalorder %s222, %s223
    %p235 = scmp.eq.s32.totalorder %s24, 1
    %p236 = por %p234, %p235
    %p238 = scmp.ne.s32.totalorder %s223, %s237
    %p239 = scmp.eq.s32.totalorder %s24, 0
    %p240 = por %p238, %p239
    %s241 = ssub.s32 %s18, %s25
    %p242 = scmp.eq.s32.totalorder %s241, 0
    %s244 = sadd.s32 %s243, 1
    %s245 = scalar_select %p242, %s243, %s244
    %p248 = pneg %p242
    %p249 = scmp.eq.s32.totalorder %s18, 1
    %p250 = por %p248, %p249
    %p251 = scmp.ne.s32.totalorder %s243, %s246
    %p252 = scmp.eq.s32.totalorder %s18, 0
    %p253 = por %p251, %p252
    %p254 = scmp.ne.s32.totalorder %s243, %s246
    %p255 = scmp.eq.s32.totalorder %s23, 1
    %p256 = por %p254, %p255
    %p257 = scmp.ne.s32.totalorder %s246, %s247
    %p258 = scmp.eq.s32.totalorder %s23, 0
    %p259 = por %p257, %p258
    %p260 = scmp.ne.s32.totalorder %s246, %s247
    %p261 = scmp.eq.s32.totalorder %s24, 1
    %p262 = por %p260, %p261
    %p264 = scmp.ne.s32.totalorder %s247, %s263
    %p265 = scmp.eq.s32.totalorder %s24, 0
    %p266 = por %p264, %p265
    %s267 = ssub.s32 %s18, %s25
    %p268 = scmp.eq.s32.totalorder %s267, 0
    %s270 = sadd.s32 %s269, 1
    %s271 = scalar_select %p268, %s269, %s270
    %p274 = pneg %p268
    %p275 = scmp.eq.s32.totalorder %s18, 1
    %p276 = por %p274, %p275
    %p277 = scmp.ne.s32.totalorder %s269, %s272
    %p278 = scmp.eq.s32.totalorder %s18, 0
    %p279 = por %p277, %p278
    %p280 = scmp.ne.s32.totalorder %s269, %s272
    %p281 = scmp.eq.s32.totalorder %s23, 1
    %p282 = por %p280, %p281
    %p283 = scmp.ne.s32.totalorder %s272, %s273
    %p284 = scmp.eq.s32.totalorder %s23, 0
    %p285 = por %p283, %p284
    %p286 = scmp.ne.s32.totalorder %s272, %s273
    %p287 = scmp.eq.s32.totalorder %s24, 1
    %p288 = por %p286, %p287
    %p290 = scmp.ne.s32.totalorder %s273, %s289
    %p291 = scmp.eq.s32.totalorder %s24, 0
    %p292 = por %p290, %p291
    %p293 = scmp.le.s32.totalorder 1, %s18
    %p294 = scmp.lt.s32.totalorder %s18, 3
    %p295 = pnand %p293, %p294
    %p296 = pneg %p295
    // Predicated region
    $region9: #{ssd_forward.1} parent=5 // pred_check
      _
    $region10: #{ssd_forward.1} parent=5 // pred_check_branch
      %298 = sbr.rel (%p295) target = $region12
    $region11: #{ssd_forward.1} parent=5 // pred_region
      %s299 = ssub.s32 %s18, 1
      // Predicated region
      $region13: #{ssd_forward.1} parent=11 // pred_check
        %p300 = pneg %p65
      $region14: #{ssd_forward.1} parent=11 // pred_check_branch
        %302 = sbr.rel (%p300) target = $region16
      $region15: #{ssd_forward.1} parent=11 // pred_region
        _
      $region16: #{ssd_forward.1} parent=11 // pred_fallthru
        _
      // Predicated region
      $region17: #{ssd_forward.1} parent=11 // pred_check
        %p303 = pneg %p86
      $region18: #{ssd_forward.1} parent=11 // pred_check_branch
        %305 = sbr.rel (%p303) target = $region20
      $region19: #{ssd_forward.1} parent=11 // pred_region
        _
      $region20: #{ssd_forward.1} parent=11 // pred_fallthru
        _
      // Predicated region
      $region21: #{ssd_forward.1} parent=11 // pred_check
        %p306 = pneg %p107
      $region22: #{ssd_forward.1} parent=11 // pred_check_branch
        %308 = sbr.rel (%p306) target = $region24
      $region23: #{ssd_forward.1} parent=11 // pred_region
        _
      $region24: #{ssd_forward.1} parent=11 // pred_fallthru
        _
      // Predicated region
      $region25: #{ssd_forward.1} parent=11 // pred_check
        %p309 = pneg %p128
      $region26: #{ssd_forward.1} parent=11 // pred_check_branch
        %311 = sbr.rel (%p309) target = $region28
      $region27: #{ssd_forward.1} parent=11 // pred_region
        _
      $region28: #{ssd_forward.1} parent=11 // pred_fallthru
        _
      // Predicated region
      $region29: #{ssd_forward.1} parent=11 // pred_check
        %p312 = pneg %p149
      $region30: #{ssd_forward.1} parent=11 // pred_check_branch
        %314 = sbr.rel (%p312) target = $region32
      $region31: #{ssd_forward.1} parent=11 // pred_region
        _
      $region32: #{ssd_forward.1} parent=11 // pred_fallthru
        _
      // Predicated region
      $region33: #{ssd_forward.1} parent=11 // pred_check
        %p315 = pneg %p170
      $region34: #{ssd_forward.1} parent=11 // pred_check_branch
        %317 = sbr.rel (%p315) target = $region36
      $region35: #{ssd_forward.1} parent=11 // pred_region
        _
      $region36: #{ssd_forward.1} parent=11 // pred_fallthru
        _
      // Predicated region
      $region37: #{ssd_forward.1} parent=11 // pred_check
        %p318 = pneg %p191
      $region38: #{ssd_forward.1} parent=11 // pred_check_branch
        %320 = sbr.rel (%p318) target = $region40
      $region39: #{ssd_forward.1} parent=11 // pred_region
        _
      $region40: #{ssd_forward.1} parent=11 // pred_fallthru
        _
      // Predicated region
      $region41: #{ssd_forward.1} parent=11 // pred_check
        %p321 = pneg %p212
      $region42: #{ssd_forward.1} parent=11 // pred_check_branch
        %323 = sbr.rel (%p321) target = $region44
      $region43: #{ssd_forward.1} parent=11 // pred_region
        _
      $region44: #{ssd_forward.1} parent=11 // pred_fallthru
        _
      // Predicated region
      $region45: #{ssd_forward.1} parent=11 // pred_check
        %p324 = pneg %p233
      $region46: #{ssd_forward.1} parent=11 // pred_check_branch
        %326 = sbr.rel (%p324) target = $region48
      $region47: #{ssd_forward.1} parent=11 // pred_region
        _
      $region48: #{ssd_forward.1} parent=11 // pred_fallthru
        _
    $region12: #{ssd_forward.1} parent=5 // pred_fallthru
      _
    %p327 = scmp.lt.s32.totalorder %s18, 2
    // Predicated region
    $region49: #{ssd_forward.1} parent=5 // pred_check
      %p328 = pneg %p327
    $region50: #{ssd_forward.1} parent=5 // pred_check_branch
      %330 = sbr.rel (%p328) target = $region52
    $region51: #{ssd_forward.1} parent=5 // pred_region
      // Predicated region
      $region53: #{ssd_forward.1} parent=51 // pred_check
        %p331 = pneg %p38
      $region54: #{ssd_forward.1} parent=51 // pred_check_branch
        %333 = sbr.rel (%p331) target = $region56
      $region55: #{ssd_forward.1} parent=51 // pred_region
        %p334 = scmp.lt.s32.totalorder %s18, 1
        %s335 = scalar_select %p334, %s18, 1
        %s336 = smul.addr %s335, 3
        %s337 = smul.addr %s336, 4
        %s338 = scalar_lea.vmem %s0, %s337
      $region56: #{ssd_forward.1} parent=51 // pred_fallthru
        _
    $region52: #{ssd_forward.1} parent=5 // pred_fallthru
      _
    %p339 = scmp.le.s32.totalorder 1, %s18
    %p340 = scmp.lt.s32.totalorder %s18, 3
    %p341 = pnand %p339, %p340
    %p342 = pneg %p341
    // Predicated region
    $region57: #{ssd_forward.1} parent=5 // pred_check
      _
    $region58: #{ssd_forward.1} parent=5 // pred_check_branch
      %344 = sbr.rel (%p341) target = $region60
    $region59: #{ssd_forward.1} parent=5 // pred_region
      %s345 = ssub.s32 %s18, 1
      %p346 = scmp.lt.s32.totalorder %s23, 1
      %s347 = scalar_select %p346, %s23, 1
      %s348 = smul.addr %s347, 3
      %s349 = smul.addr %s348, 4
      %s350 = scalar_lea.vmem %s0, %s349
      %p351 = pneg %p44
      %p352 = pneg %p41
      %p353 = pneg %p65
      %p354 = pneg %p62
      %p355 = pneg %p86
      %p356 = pneg %p83
      %p357 = pneg %p107
      %p358 = pneg %p104
      %p359 = pneg %p128
      %p360 = pneg %p125
      %p361 = pneg %p149
      %p362 = pneg %p146
      %p363 = pneg %p170
      %p364 = pneg %p167
      %p365 = pneg %p191
      %p366 = pneg %p188
      %p367 = pneg %p212
      %p368 = pneg %p209
      %p369 = pneg %p233
      %p370 = pneg %p230
      %p371 = pneg %p259
      %p372 = pneg %p256
      %p373 = scmp.lt.s32.totalorder %s23, 1
      %s374 = scalar_select %p373, %s23, 1
      %s375 = smul.addr %s374, 4
      %s376 = smul.addr %s375, 8
      %s377 = scalar_lea.vmem %s10, %s376
      %p378 = pneg %p285
      %p379 = pneg %p282
      %p380 = scmp.lt.s32.totalorder %s23, 1
      %s381 = scalar_select %p380, %s23, 1
      %s382 = smul.addr %s381, 4
      %s383 = smul.addr %s382, 8
      %s384 = scalar_lea.vmem %s11, %s383
      %p385 = scmp.lt.s32.totalorder %s23, 1
      %s386 = scalar_select %p385, %s23, 1
      %s387 = smul.addr %s386, 3
      %s388 = smul.addr %s387, 4
      %s389 = scalar_lea.vmem %s0, %s388
      %p390 = scmp.lt.s32.totalorder %s23, 1
      %s391 = scalar_select %p390, %s23, 1
      %s392 = smul.addr %s391, 4
      %s393 = smul.addr %s392, 8
      %s394 = scalar_lea.vmem %s10, %s393
      %p395 = scmp.lt.s32.totalorder %s23, 1
      %s396 = scalar_select %p395, %s23, 1
      %s397 = smul.addr %s396, 4
      %s398 = smul.addr %s397, 8
      %s399 = scalar_lea.vmem %s11, %s398
      %v401 = vld [vmem:[%s389] sm:$0xff]
      %v402 = vld [vmem:[%s389 + $0x8] sm:$0xf]
      %v405 = vunpack.c.l.b16 %v401
      %v406 = vunpack.c.h.b16 %v401
      %v407 = vunpack.c.l.b16 %v402
      %v408 = vpack.c.b16 %v405, %v405
      %v409 = vpack.c.b16 %v406, %v406
      %v410 = vpack.c.b16 %v407, %v407
      %411 = vrot.lane.b32.xlu0 %v408, 127
      %v412 = vpop.permute.xlu0 %411
      %413 = vrot.lane.b32.xlu0 %v409, 127
      %v414 = vpop.permute.xlu0 %413
      %415 = vrot.lane.b32.xlu0 %v410, 127
      %v416 = vpop.permute.xlu0 %415
      %vm417 = vcmask 1039360
      %v418 = vsel %vm417, %v412, %v414
      %v419 = vsel %vm417, %v414, %v416
      %420 = vrot.lane.b32.xlu0 %v408, 126
      %v421 = vpop.permute.xlu0 %420
      %422 = vrot.lane.b32.xlu0 %v409, 126
      %v423 = vpop.permute.xlu0 %422
      %424 = vrot.lane.b32.xlu0 %v410, 126
      %v425 = vpop.permute.xlu0 %424
      %vm426 = vcmask 1031168
      %v427 = vsel %vm426, %v421, %v423
      %v428 = vsel %vm426, %v423, %v425
      %429 = vrot.lane.b32.xlu0 %v408, 110
      %v430 = vpop.permute.xlu0 %429
      %431 = vrot.lane.b32.xlu0 %v409, 110
      %v432 = vpop.permute.xlu0 %431
      %433 = vrot.lane.b32.xlu0 %v410, 110
      %v434 = vpop.permute.xlu0 %433
      %vm435 = vcmask 900096
      %v436 = vsel %vm435, %v430, %v432
      %v437 = vsel %vm435, %v432, %v434
      %438 = vrot.lane.b32.xlu0 %v408, 109
      %v439 = vpop.permute.xlu0 %438
      %440 = vrot.lane.b32.xlu0 %v409, 109
      %v441 = vpop.permute.xlu0 %440
      %442 = vrot.lane.b32.xlu0 %v410, 109
      %v443 = vpop.permute.xlu0 %442
      %vm444 = vcmask 891904
      %v445 = vsel %vm444, %v439, %v441
      %v446 = vsel %vm444, %v441, %v443
      %447 = vrot.lane.b32.xlu0 %v408, 108
      %v448 = vpop.permute.xlu0 %447
      %449 = vrot.lane.b32.xlu0 %v409, 108
      %v450 = vpop.permute.xlu0 %449
      %451 = vrot.lane.b32.xlu0 %v410, 108
      %v452 = vpop.permute.xlu0 %451
      %vm453 = vcmask 883712
      %v454 = vsel %vm453, %v448, %v450
      %v455 = vsel %vm453, %v450, %v452
      %456 = vrot.lane.b32.xlu0 %v408, 92
      %v457 = vpop.permute.xlu0 %456
      %458 = vrot.lane.b32.xlu0 %v409, 92
      %v459 = vpop.permute.xlu0 %458
      %460 = vrot.lane.b32.xlu0 %v410, 92
      %v461 = vpop.permute.xlu0 %460
      %vm462 = vcmask 752640
      %v463 = vsel %vm462, %v457, %v459
      %v464 = vsel %vm462, %v459, %v461
      %465 = vrot.lane.b32.xlu0 %v408, 91
      %v466 = vpop.permute.xlu0 %465
      %467 = vrot.lane.b32.xlu0 %v409, 91
      %v468 = vpop.permute.xlu0 %467
      %469 = vrot.lane.b32.xlu0 %v410, 91
      %v470 = vpop.permute.xlu0 %469
      %vm471 = vcmask 744448
      %v472 = vsel %vm471, %v466, %v468
      %v473 = vsel %vm471, %v468, %v470
      %474 = vrot.lane.b32.xlu0 %v408, 90
      %v475 = vpop.permute.xlu0 %474
      %476 = vrot.lane.b32.xlu0 %v409, 90
      %v477 = vpop.permute.xlu0 %476
      %478 = vrot.lane.b32.xlu0 %v410, 90
      %v479 = vpop.permute.xlu0 %478
      %vm480 = vcmask 736256
      %v481 = vsel %vm480, %v475, %v477
      %v482 = vsel %vm480, %v477, %v479
      %vm483 = vcmask 1043456
      %v486 = vsel %vm483, %v408, %v418
      %v490 = vsel %vm483, %v409, %v419
      %v494 = vsel %vm483, %v410, %v416
      %v498 = vsel %vm483, %v427, %v436
      %v502 = vsel %vm483, %v428, %v437
      %v506 = vsel %vm483, %v425, %v434
      %v510 = vsel %vm483, %v445, %v454
      %v514 = vsel %vm483, %v446, %v455
      %v518 = vsel %vm483, %v443, %v452
      %v522 = vsel %vm483, %v463, %v472
      %v526 = vsel %vm483, %v464, %v473
      %v530 = vsel %vm483, %v461, %v470
      %v532 = vld [vmem:[%s1] sm:$0xf]
      %v533 = vld [vmem:[%s2] sm:$0xff]
      %535 = vset.pattern.permute.xlu0 0
      %536 = vperm.xlu0 %535, %v533
      %v537 = vpop.permute.xlu0 %536
      %vm539 = vcmask 588800
      %v541 = vsel %vm539, %v532, 0
      %v544 = vsel %vm483, %v481, 0
      %v547 = vsel %vm483, %v482, 0
      %v550 = vsel %vm483, %v479, 0
      %552 = vmatpush.bf16.msra.mxu0 0
      %553 = vmatpush.bf16.msra.mxu0 0
      %554 = vmatpush.bf16.msra.mxu0 0
      %555 = vmatpush.bf16.msra.mxu0 %v544
      %556 = vmatpush.bf16.msra.mxu0 %v522
      %557 = vmatpush.bf16.msra.mxu0 %v510
      %558 = vmatpush.bf16.msra.mxu0 %v498
      %559 = vmatpush.bf16.msra.mxu0 %v486
      %560 = vmatmul.bf16.gmra.mxu0 %v541
      %v561 = vpop.f32.mrf.mxu0
      %v562 = vadd.f32 %v537, %v561
      %v563 = vpop.f32.mrf.mxu0
      %564 = vdwg.mxu0
      %565 = vmatpush.bf16.msra.mxu0 0
      %566 = vmatpush.bf16.msra.mxu0 0
      %567 = vmatpush.bf16.msra.mxu0 0
      %568 = vmatpush.bf16.msra.mxu0 %v547
      %569 = vmatpush.bf16.msra.mxu0 %v526
      %570 = vmatpush.bf16.msra.mxu0 %v514
      %571 = vmatpush.bf16.msra.mxu0 %v502
      %572 = vmatpush.bf16.msra.mxu0 %v490
      %573 = vmatmul.bf16.gmra.mxu0 %v541
      %v574 = vpop.f32.mrf.mxu0
      %v575 = vadd.f32 %v537, %v574
      %v576 = vpop.f32.mrf.mxu0
      %577 = vdwg.mxu0
      %578 = vmatpush.bf16.msra.mxu0 0
      %579 = vmatpush.bf16.msra.mxu0 0
      %580 = vmatpush.bf16.msra.mxu0 0
      %581 = vmatpush.bf16.msra.mxu0 %v550
      %582 = vmatpush.bf16.msra.mxu0 %v530
      %583 = vmatpush.bf16.msra.mxu0 %v518
      %584 = vmatpush.bf16.msra.mxu0 %v506
      %585 = vmatpush.bf16.msra.mxu0 %v494
      %586 = vmatmul.bf16.gmra.mxu0 %v541
      %v587 = vpop.f32.mrf.mxu0
      %v588 = vadd.f32 %v537, %v587
      %v589 = vpop.f32.mrf.mxu0
      %590 = vdwg.mxu0
      %v591 = vmax.f32 %v562, 0.0
      %v592 = vmax.f32 %v575, 0.0
      %v593 = vmax.f32 %v588, 0.0
      %v594 = vpack.c.bf16 %v591, %v591
      %v595 = vpack.c.bf16 %v592, %v592
      %v596 = vpack.c.bf16 %v593, %v593
      %v597 = vld [vmem:[%s3] sm:$0xf]
      %v598 = vld [vmem:[%s3 + $0x4] sm:$0xf]
      %v599 = vld [vmem:[%s3 + $0x8] sm:$0xf]
      %v600 = vld [vmem:[%s3 + $0xc] sm:$0xf]
      %v601 = vld [vmem:[%s3 + $0x10] sm:$0xf]
      %v602 = vld [vmem:[%s3 + $0x14] sm:$0xf]
      %v603 = vld [vmem:[%s3 + $0x18] sm:$0xf]
      %v604 = vld [vmem:[%s3 + $0x1c] sm:$0xf]
      %v605 = vld [vmem:[%s3 + $0x20] sm:$0xf]
      %v606 = vld [vmem:[%s3 + $0x24] sm:$0xf]
      %v607 = vld [vmem:[%s3 + $0x28] sm:$0xf]
      %v608 = vld [vmem:[%s3 + $0x2c] sm:$0xf]
      %v609 = vld [vmem:[%s3 + $0x30] sm:$0xf]
      %v610 = vld [vmem:[%s3 + $0x34] sm:$0xf]
      %v611 = vld [vmem:[%s3 + $0x38] sm:$0xf]
      %v612 = vld [vmem:[%s3 + $0x3c] sm:$0xf]
      %v613 = vld [vmem:[%s3 + $0x40] sm:$0xf]
      %v614 = vld [vmem:[%s3 + $0x44] sm:$0xf]
      %v615 = vld [vmem:[%s3 + $0x48] sm:$0xf]
      %v616 = vld [vmem:[%s3 + $0x4c] sm:$0xf]
      %v617 = vld [vmem:[%s3 + $0x50] sm:$0xf]
      %v618 = vld [vmem:[%s3 + $0x54] sm:$0xf]
      %v619 = vld [vmem:[%s3 + $0x58] sm:$0xf]
      %v620 = vld [vmem:[%s3 + $0x5c] sm:$0xf]
      %v621 = vld [vmem:[%s3 + $0x60] sm:$0xf]
      %v622 = vld [vmem:[%s3 + $0x64] sm:$0xf]
      %v623 = vld [vmem:[%s3 + $0x68] sm:$0xf]
      %v624 = vld [vmem:[%s3 + $0x6c] sm:$0xf]
      %v625 = vld [vmem:[%s3 + $0x70] sm:$0xf]
      %v626 = vld [vmem:[%s3 + $0x74] sm:$0xf]
      %v627 = vld [vmem:[%s3 + $0x78] sm:$0xf]
      %v628 = vld [vmem:[%s3 + $0x7c] sm:$0xf]
      %v629 = vld [vmem:[%s3 + $0x80] sm:$0xf]
      %v630 = vld [vmem:[%s3 + $0x84] sm:$0xf]
      %v631 = vld [vmem:[%s3 + $0x88] sm:$0xf]
      %v632 = vld [vmem:[%s3 + $0x8c] sm:$0xf]
      %v669 = vunpack.c.l.b16 %v597
      %v670 = vunpack.c.l.b16 %v598
      %v671 = vunpack.c.l.b16 %v599
      %v672 = vunpack.c.l.b16 %v600
      %v673 = vunpack.c.l.b16 %v601
      %v674 = vunpack.c.l.b16 %v602
      %v675 = vunpack.c.l.b16 %v603
      %v676 = vunpack.c.l.b16 %v604
      %v677 = vunpack.c.l.b16 %v605
      %v678 = vunpack.c.l.b16 %v606
      %v679 = vunpack.c.l.b16 %v607
      %v680 = vunpack.c.l.b16 %v608
      %v681 = vunpack.c.l.b16 %v609
      %v682 = vunpack.c.l.b16 %v610
      %v683 = vunpack.c.l.b16 %v611
      %v684 = vunpack.c.l.b16 %v612
      %v685 = vunpack.c.l.b16 %v613
      %v686 = vunpack.c.l.b16 %v614
      %v687 = vunpack.c.l.b16 %v615
      %v688 = vunpack.c.l.b16 %v616
      %v689 = vunpack.c.l.b16 %v617
      %v690 = vunpack.c.l.b16 %v618
      %v691 = vunpack.c.l.b16 %v619
      %v692 = vunpack.c.l.b16 %v620
      %v693 = vunpack.c.l.b16 %v621
      %v694 = vunpack.c.l.b16 %v622
      %v695 = vunpack.c.l.b16 %v623
      %v696 = vunpack.c.l.b16 %v624
      %v697 = vunpack.c.l.b16 %v625
      %v698 = vunpack.c.l.b16 %v626
      %v699 = vunpack.c.l.b16 %v627
      %v700 = vunpack.c.l.b16 %v628
      %v701 = vunpack.c.l.b16 %v629
      %v702 = vunpack.c.l.b16 %v630
      %v703 = vunpack.c.l.b16 %v631
      %v704 = vunpack.c.l.b16 %v632
      %v705 = vpack.c.b16 %v670, %v669
      %v706 = vpack.c.b16 %v672, %v671
      %v707 = vpack.c.b16 %v674, %v673
      %v708 = vpack.c.b16 %v676, %v675
      %v709 = vpack.c.b16 %v678, %v677
      %v710 = vpack.c.b16 %v680, %v679
      %v711 = vpack.c.b16 %v682, %v681
      %v712 = vpack.c.b16 %v684, %v683
      %v713 = vpack.c.b16 %v686, %v685
      %v714 = vpack.c.b16 %v688, %v687
      %v715 = vpack.c.b16 %v690, %v689
      %v716 = vpack.c.b16 %v692, %v691
      %v717 = vpack.c.b16 %v694, %v693
      %v718 = vpack.c.b16 %v696, %v695
      %v719 = vpack.c.b16 %v698, %v697
      %v720 = vpack.c.b16 %v700, %v699
      %v721 = vpack.c.b16 %v702, %v701
      %v722 = vpack.c.b16 %v704, %v703
      %vm741 = vcmask 261120
      %v743 = vsel %vm741, %v596, 0
      %745 = vmatpush.bf16.msra.mxu0 %v712
      %746 = vmatpush.bf16.msra.mxu0 %v711
      %747 = vmatpush.bf16.msra.mxu0 %v710
      %748 = vmatpush.bf16.msra.mxu0 %v709
      %749 = vmatpush.bf16.msra.mxu0 %v708
      %750 = vmatpush.bf16.msra.mxu0 %v707
      %751 = vmatpush.bf16.msra.mxu0 %v706
      %752 = vmatpush.bf16.msra.mxu0 %v705
      %753 = vmatmul.bf16.gmra.mxu0 %v594
      %v754 = vpop.f32.mrf.mxu0
      %v755 = vadd.f32 0.0, %v754
      %v756 = vpop.f32.mrf.mxu0
      %757 = vdwg.mxu0
      %758 = vmatpush.bf16.msra.mxu0 %v720
      %759 = vmatpush.bf16.msra.mxu0 %v719
      %760 = vmatpush.bf16.msra.mxu0 %v718
      %761 = vmatpush.bf16.msra.mxu0 %v717
      %762 = vmatpush.bf16.msra.mxu0 %v716
      %763 = vmatpush.bf16.msra.mxu0 %v715
      %764 = vmatpush.bf16.msra.mxu0 %v714
      %765 = vmatpush.bf16.msra.mxu0 %v713
      %766 = vmatmul.bf16.gmra.mxu0 %v595
      %v767 = vpop.f32.mrf.mxu0
      %v768 = vadd.f32 %v755, %v767
      %v769 = vpop.f32.mrf.mxu0
      %770 = vdwg.mxu0
      %771 = vmatpush.bf16.msra.mxu0 0
      %772 = vmatpush.bf16.msra.mxu0 0
      %773 = vmatpush.bf16.msra.mxu0 0
      %774 = vmatpush.bf16.msra.mxu0 0
      %775 = vmatpush.bf16.msra.mxu0 0
      %776 = vmatpush.bf16.msra.mxu0 0
      %777 = vmatpush.bf16.msra.mxu0 %v722
      %778 = vmatpush.bf16.msra.mxu0 %v721
      %779 = vmatmul.bf16.gmra.mxu0 %v743
      %v780 = vpop.f32.mrf.mxu0
      %v781 = vadd.f32 %v768, %v780
      %v782 = vpop.f32.mrf.mxu0
      %783 = vdwg.mxu0
      %v784 = vpack.c.bf16 %v781, %v781
      %v786 = vunpack.c.l.b16 %v784
      %v787 = vpack.c.b16 %v786, %v786
      %788 = vrot.lane.b32.xlu0 %v787, 127
      %v789 = vpop.permute.xlu0 %788
      %790 = vrot.lane.b32.xlu0 %v787, 126
      %v791 = vpop.permute.xlu0 %790
      %792 = vrot.lane.b32.xlu0 %v787, 118
      %v793 = vpop.permute.xlu0 %792
      %794 = vrot.lane.b32.xlu0 %v787, 117
      %v795 = vpop.permute.xlu0 %794
      %796 = vrot.lane.b32.xlu0 %v787, 116
      %v797 = vpop.permute.xlu0 %796
      %798 = vrot.lane.b32.xlu0 %v787, 108
      %v799 = vpop.permute.xlu0 %798
      %800 = vrot.lane.b32.xlu0 %v787, 107
      %v801 = vpop.permute.xlu0 %800
      %802 = vrot.lane.b32.xlu0 %v787, 106
      %v803 = vpop.permute.xlu0 %802
      %v806 = vsel %vm483, %v784, %v789
      %v810 = vsel %vm483, %v791, %v793
      %v814 = vsel %vm483, %v795, %v797
      %v818 = vsel %vm483, %v799, %v801
      %v820 = vld [vmem:[%s4] sm:$0xf]
      %v821 = vld [vmem:[%s4 + $0x4] sm:$0xf]
      %v822 = vld [vmem:[%s4 + $0x8] sm:$0xf]
      %v823 = vld [vmem:[%s4 + $0xc] sm:$0xf]
      %v824 = vld [vmem:[%s4 + $0x10] sm:$0x3]
      %v830 = vunpack.c.l.b16 %v820
      %v831 = vunpack.c.l.b16 %v821
      %v832 = vunpack.c.l.b16 %v822
      %v833 = vunpack.c.l.b16 %v823
      %v834 = vunpack.c.l.b16 %v824
      %v835 = vpack.c.b16 %v831, %v830
      %v836 = vpack.c.b16 %v833, %v832
      %v837 = vpack.c.b16 %v834, %v834
      %v839 = vsel %vm539, %v835, 0
      %v842 = vsel %vm539, %v836, 0
      %v845 = vsel %vm539, %v837, 0
      %v848 = vsel %vm483, %v803, 0
      %850 = vmatpush.bf16.msra.mxu0 0
      %851 = vmatpush.bf16.msra.mxu0 0
      %852 = vmatpush.bf16.msra.mxu0 0
      %853 = vmatpush.bf16.msra.mxu0 %v848
      %854 = vmatpush.bf16.msra.mxu0 %v818
      %855 = vmatpush.bf16.msra.mxu0 %v814
      %856 = vmatpush.bf16.msra.mxu0 %v810
      %857 = vmatpush.bf16.msra.mxu0 %v806
      %858 = vmatmul.bf16.gmra.mxu0 %v839
      %v859 = vpop.f32.mrf.mxu0
      %v860 = vadd.f32 0.0, %v859
      %v861 = vpop.f32.mrf.mxu0
      %v862 = vadd.f32 0.0, %v861
      %863 = vmatmul.bf16.gmra.mxu0 %v842
      %v864 = vpop.f32.mrf.mxu0
      %v865 = vadd.f32 0.0, %v864
      %v866 = vpop.f32.mrf.mxu0
      %v867 = vadd.f32 0.0, %v866
      %868 = vmatmul.bf16.gmra.mxu0 %v845
      %v869 = vpop.f32.mrf.mxu0
      %v870 = vadd.f32 0.0, %v869
      %v871 = vpop.f32.mrf.mxu0
      %872 = vdwg.mxu0
      %v873 = vld [vmem:[%s5] sm:$0xff]
      %875 = vset.pattern.permute.xlu0 0
      %876 = vperm.xlu0 %875, %v873
      %v877 = vpop.permute.xlu0 %876
      %v879 = vadd.f32 %v860, %v877
      %v880 = vmax.f32 %v879, 0.0
      %v881 = vpack.c.bf16 %v880, %v880
      %v882 = vld [vmem:[%s6] sm:$0xff]
      %v883 = vld [vmem:[%s6 + $0x8] sm:$0xff]
      %v884 = vld [vmem:[%s6 + $0x10] sm:$0xff]
      %v885 = vld [vmem:[%s6 + $0x18] sm:$0xf]
      %v886 = vadd.f32 %v862, %v882
      %v887 = vadd.f32 %v865, %v883
      %v888 = vadd.f32 %v867, %v884
      %v889 = vadd.f32 %v870, %v885
      %vm890 = vcmask 654336
      %891 = vst.msk [vmem:[%s394] sm:$0xff] %vm890, %v886
      %892 = vst.msk [vmem:[%s394 + $0x8] sm:$0xff] %vm890, %v887
      %893 = vst.msk [vmem:[%s394 + $0x10] sm:$0xff] %vm890, %v888
      %vm894 = vcmask 650240
      %895 = vst.msk [vmem:[%s394 + $0x18] sm:$0xf] %vm894, %v889
      %v896 = vld [vmem:[%s7] sm:$0xf]
      %v897 = vld [vmem:[%s7 + $0x4] sm:$0xf]
      %v898 = vld [vmem:[%s7 + $0x8] sm:$0xf]
      %v899 = vld [vmem:[%s7 + $0xc] sm:$0xf]
      %v900 = vld [vmem:[%s7 + $0x10] sm:$0xf]
      %v901 = vld [vmem:[%s7 + $0x14] sm:$0xf]
      %v902 = vld [vmem:[%s7 + $0x18] sm:$0xf]
      %v903 = vld [vmem:[%s7 + $0x1c] sm:$0xf]
      %v904 = vld [vmem:[%s7 + $0x20] sm:$0xf]
      %v905 = vld [vmem:[%s7 + $0x24] sm:$0xf]
      %v916 = vunpack.c.l.b16 %v896
      %v917 = vunpack.c.l.b16 %v897
      %v918 = vunpack.c.l.b16 %v898
      %v919 = vunpack.c.l.b16 %v899
      %v920 = vunpack.c.l.b16 %v900
      %v921 = vunpack.c.l.b16 %v901
      %v922 = vunpack.c.l.b16 %v902
      %v923 = vunpack.c.l.b16 %v903
      %v924 = vunpack.c.l.b16 %v904
      %v925 = vunpack.c.l.b16 %v905
      %v926 = vpack.c.b16 %v917, %v916
      %v927 = vpack.c.b16 %v919, %v918
      %v928 = vpack.c.b16 %v921, %v920
      %v929 = vpack.c.b16 %v923, %v922
      %v930 = vpack.c.b16 %v925, %v924
      %v937 = vsel %vm890, %v881, 0
      %939 = vmatpush.bf16.msra.mxu0 0
      %940 = vmatpush.bf16.msra.mxu0 0
      %941 = vmatpush.bf16.msra.mxu0 0
      %942 = vmatpush.bf16.msra.mxu0 %v930
      %943 = vmatpush.bf16.msra.mxu0 %v929
      %944 = vmatpush.bf16.msra.mxu0 %v928
      %945 = vmatpush.bf16.msra.mxu0 %v927
      %946 = vmatpush.bf16.msra.mxu0 %v926
      %947 = vmatmul.bf16.gmra.mxu0 %v937
      %v948 = vpop.f32.mrf.mxu0
      %v949 = vadd.f32 0.0, %v948
      %v950 = vpop.f32.mrf.mxu0
      %951 = vdwg.mxu0
      %v952 = vpack.c.bf16 %v949, %v949
      %v954 = vunpack.c.l.b16 %v952
      %v955 = vpack.c.b16 %v954, %v954
      %956 = vrot.lane.b32.xlu0 %v955, 127
      %v957 = vpop.permute.xlu0 %956
      %958 = vrot.lane.b32.xlu0 %v955, 126
      %v959 = vpop.permute.xlu0 %958
      %960 = vrot.lane.b32.xlu0 %v955, 122
      %v961 = vpop.permute.xlu0 %960
      %962 = vrot.lane.b32.xlu0 %v955, 121
      %v963 = vpop.permute.xlu0 %962
      %964 = vrot.lane.b32.xlu0 %v955, 120
      %v965 = vpop.permute.xlu0 %964
      %966 = vrot.lane.b32.xlu0 %v955, 116
      %v967 = vpop.permute.xlu0 %966
      %968 = vrot.lane.b32.xlu0 %v955, 115
      %v969 = vpop.permute.xlu0 %968
      %970 = vrot.lane.b32.xlu0 %v955, 114
      %v971 = vpop.permute.xlu0 %970
      %v974 = vsel %vm483, %v952, %v957
      %v978 = vsel %vm483, %v959, %v961
      %v982 = vsel %vm483, %v963, %v965
      %v986 = vsel %vm483, %v967, %v969
      %v988 = vld [vmem:[%s8] sm:$0xf]
      %v989 = vld [vmem:[%s8 + $0x4] sm:$0xf]
      %v990 = vld [vmem:[%s8 + $0x8] sm:$0xf]
      %v991 = vld [vmem:[%s8 + $0xc] sm:$0x3]
      %v992 = vld [vmem:[%s9] sm:$0xff]
      %v993 = vld [vmem:[%s9 + $0x8] sm:$0xff]
      %v994 = vld [vmem:[%s9 + $0x10] sm:$0xff]
      %v995 = vld [vmem:[%s9 + $0x18] sm:$0xf]
      %v1000 = vunpack.c.l.b16 %v988
      %v1001 = vunpack.c.l.b16 %v989
      %v1002 = vunpack.c.l.b16 %v990
      %v1003 = vunpack.c.l.b16 %v991
      %v1004 = vpack.c.b16 %v1001, %v1000
      %v1005 = vpack.c.b16 %v1003, %v1002
      %v1007 = vsel %vm539, %v1004, 0
      %v1010 = vsel %vm539, %v1005, 0
      %v1013 = vsel %vm483, %v971, 0
      %1015 = vmatpush.bf16.msra.mxu0 0
      %1016 = vmatpush.bf16.msra.mxu0 0
      %1017 = vmatpush.bf16.msra.mxu0 0
      %1018 = vmatpush.bf16.msra.mxu0 %v1013
      %1019 = vmatpush.bf16.msra.mxu0 %v986
      %1020 = vmatpush.bf16.msra.mxu0 %v982
      %1021 = vmatpush.bf16.msra.mxu0 %v978
      %1022 = vmatpush.bf16.msra.mxu0 %v974
      %1023 = vmatmul.bf16.gmra.mxu0 %v1007
      %v1024 = vpop.f32.mrf.mxu0
      %v1025 = vadd.f32 %v992, %v1024
      %v1026 = vpop.f32.mrf.mxu0
      %v1027 = vadd.f32 %v993, %v1026
      %1028 = vmatmul.bf16.gmra.mxu0 %v1010
      %v1029 = vpop.f32.mrf.mxu0
      %v1030 = vadd.f32 %v994, %v1029
      %v1031 = vpop.f32.mrf.mxu0
      %v1032 = vadd.f32 %v995, %v1031
      %1033 = vdwg.mxu0
      %vm1034 = vcmask 195584
      %1035 = vst.msk [vmem:[%s399] sm:$0xff] %vm1034, %v1025
      %1036 = vst.msk [vmem:[%s399 + $0x8] sm:$0xff] %vm1034, %v1027
      %1037 = vst.msk [vmem:[%s399 + $0x10] sm:$0xff] %vm1034, %v1030
      %vm1038 = vcmask 191488
      %1039 = vst.msk [vmem:[%s399 + $0x18] sm:$0xf] %vm1038, %v1032
      %p1040 = scmp.lt.s32.totalorder %s23, 1
      %s1041 = scalar_select %p1040, %s23, 1
      %s1042 = smul.addr %s1041, 4
      %s1043 = smul.addr %s1042, 8
      %s1044 = scalar_lea.vmem %s10, %s1043
      %p1045 = scmp.lt.s32.totalorder %s23, 1
      %s1046 = scalar_select %p1045, %s23, 1
      %s1047 = smul.addr %s1046, 4
      %s1048 = smul.addr %s1047, 8
      %s1049 = scalar_lea.vmem %s11, %s1048
      // Predicated region
      $region61: #{ssd_forward.1} parent=59 // pred_check
        %p1050 = pneg %p256
      $region62: #{ssd_forward.1} parent=59 // pred_check_branch
        %1052 = sbr.rel (%p1050) target = $region64
      $region63: #{ssd_forward.1} parent=59 // pred_region
        _
      $region64: #{ssd_forward.1} parent=59 // pred_fallthru
        _
      // Predicated region
      $region65: #{ssd_forward.1} parent=59 // pred_check
        %p1053 = pneg %p282
      $region66: #{ssd_forward.1} parent=59 // pred_check_branch
        %1055 = sbr.rel (%p1053) target = $region68
      $region67: #{ssd_forward.1} parent=59 // pred_region
        _
      $region68: #{ssd_forward.1} parent=59 // pred_fallthru
        _
    $region60: #{ssd_forward.1} parent=5 // pred_fallthru
      _
    %p1056 = scmp.le.s32.totalorder 2, %s18
    // Predicated region
    $region69: #{ssd_forward.1} parent=5 // pred_check
      %p1057 = pneg %p1056
    $region70: #{ssd_forward.1} parent=5 // pred_check_branch
      %1059 = sbr.rel (%p1057) target = $region72
    $region71: #{ssd_forward.1} parent=5 // pred_region
      %s1060 = ssub.s32 %s18, 2
      // Predicated region
      $region73: #{ssd_forward.1} parent=71 // pred_check
        %p1061 = pneg %p262
      $region74: #{ssd_forward.1} parent=71 // pred_check_branch
        %1063 = sbr.rel (%p1061) target = $region76
      $region75: #{ssd_forward.1} parent=71 // pred_region
        %p1064 = scmp.lt.s32.totalorder %s24, 1
        %s1065 = scalar_select %p1064, %s24, 1
        %s1066 = smul.addr %s1065, 4
        %s1067 = smul.addr %s1066, 8
        %s1068 = scalar_lea.vmem %s10, %s1067
      $region76: #{ssd_forward.1} parent=71 // pred_fallthru
        _
      // Predicated region
      $region77: #{ssd_forward.1} parent=71 // pred_check
        %p1069 = pneg %p288
      $region78: #{ssd_forward.1} parent=71 // pred_check_branch
        %1071 = sbr.rel (%p1069) target = $region80
      $region79: #{ssd_forward.1} parent=71 // pred_region
        %p1072 = scmp.lt.s32.totalorder %s24, 1
        %s1073 = scalar_select %p1072, %s24, 1
        %s1074 = smul.addr %s1073, 4
        %s1075 = smul.addr %s1074, 8
        %s1076 = scalar_lea.vmem %s11, %s1075
      $region80: #{ssd_forward.1} parent=71 // pred_fallthru
        _
    $region72: #{ssd_forward.1} parent=5 // pred_fallthru
      _
  $region6: #{ssd_forward.1} parent=0 // loop_footer
    %s22 = sadd.s32 1, %s18
  $region7: #{ssd_forward.1} parent=0 // loop_footer_branch
    %17 = sbr.rel target = $region3
  $region8: #{ssd_forward.1} parent=0 // loop_exit
    _

</llo_original>
